<compile_context>
chip_gen: v5e
topology: v5e:2x2
jax: 0.10.0
libtpu: 0.0.40
codegen_flags: <defaults>
</compile_context>

<pallas_src>
import jax
import jax.numpy as jnp
from jax.experimental import pallas as pl
from jax.experimental.pallas import tpu as pltpu


def _round_up(x: int, m: int) -> int:
    return ((x + m - 1) // m) * m


def _cdiv(a: int, b: int) -> int:
    return (a + b - 1) // b


def _vmem_budget_bytes() -> int:
    """Per-generation scoped-VMEM budget (leaves DMA / compiler headroom)."""
    cap = None
    try:
        info = pltpu.get_tpu_info()
        cap = getattr(info, "vmem_capacity_bytes", None)
    except Exception:
        cap = None
    if cap is None:
        return 32 * 1024 * 1024                    # conservative fallback
    if cap <= 64 * 1024 * 1024:                    # v7x: 64 MiB per TensorCore
        return 44 * 1024 * 1024
    return 96 * 1024 * 1024                        # v5e / v6e: 128 MiB


# ----------------------------- kernels ------------------------------------


def _linear_kernel(x_ref, w_ref, b_ref, o_ref):
    """Single-K plan: one (tm, tn) output tile computed in one shot."""
    o_ref[...] = (jnp.dot(x_ref[...], w_ref[...],
                          preferred_element_type=jnp.float32)
                  + b_ref[...]).astype(o_ref.dtype)


def _linear_ksplit_kernel(x_ref, w_ref, b_ref, o_ref, acc_ref):
    """K-split plan: f32 VMEM accumulator over the (last, 'arbitrary') K axis."""
    kk = pl.program_id(2)

    @pl.when(kk == 0)
    def _():
        acc_ref[...] = jnp.zeros_like(acc_ref)

    acc_ref[...] += jnp.dot(x_ref[...], w_ref[...],
                            preferred_element_type=jnp.float32)

    @pl.when(kk == pl.num_programs(2) - 1)
    def _():
        o_ref[...] = (acc_ref[...] + b_ref[...]).astype(o_ref.dtype)


# ------------------------- tile / plan selection ---------------------------


def _vmem_need(tm, tn, tk, cbytes, obytes, with_acc):
    tm_s = _round_up(tm, 8)
    tn_l = _round_up(tn, 128)
    tk_l = _round_up(tk, 128)
    need = 2 * (tm_s * tk_l + tk_l * tn_l) * cbytes   # double-buffered x / W tiles
    need += 2 * 8 * tn_l * 4                          # bias tile (f32, sublane pad)
    need += 2 * tm_s * tn_l * obytes                  # double-buffered output tile
    if with_acc:
        need += tm_s * tn_l * 4                       # f32 accumulator scratch
    return need


def _select_plan(m, n, k, cbytes, obytes, budget):
    """Returns (tm, tn, tk, k_split)."""
    m8 = _round_up(max(m, 1), 8)
    n128 = _round_up(max(n, 1), 128)
    k128 = _round_up(max(k, 1), 128)

    tm_opts = sorted({min(t, m8) for t in (1024, 512, 256, 128, 64, 32, 16, 8)},
                     reverse=True)
    tn_opts = sorted({min(t, n128) for t in (1024, 512, 256, 128)}, reverse=True)
    tm_floor = min(256, m8)
    tn_floor = min(256, n128)

    # Plan A: single-K, full-N (weight VMEM-resident across the whole grid).
    for tm in tm_opts:
        if tm < tm_floor:
            break
        if _vmem_need(tm, n, k, cbytes, obytes, False) <= budget:
            return tm, n, k, False

    # Plan B: single-K, tiled-N (no accumulator, no K grid axis).
    for tm in tm_opts:
        if tm < tm_floor:
            break
        for tn in tn_opts:
            if tn < tn_floor:
                break
            if _vmem_need(tm, tn, k, cbytes, obytes, False) <= budget:
                return tm, tn, k, False

    # Plan C: K-split 3-D grid with f32 accumulator; balanced tk to limit padding.
    for tk_target in (2048, 1024, 512, 256, 128):
        ksteps = _cdiv(k, tk_target)
        tk = min(_round_up(_cdiv(k, ksteps), 128), k128)
        for tm in tm_opts:
            for tn in tn_opts:
                if _vmem_need(tm, tn, tk, cbytes, obytes, True) <= budget:
                    return tm, tn, tk, True

    # Last resort: smallest tiles.
    return tm_opts[-1], tn_opts[-1], min(128, k128), True


# ------------------------------- wrapper -----------------------------------


def prepare_for_multihead_attention(x, weight, bias, heads, d_k, *,
                                    compute_dtype=jnp.bfloat16):
    """Pallas TPU equivalent of PrePareForMultiHeadAttention.forward.

    x:      (..., d_model)
    weight: (heads*d_k, d_model)    -- PyTorch nn.Linear layout
    bias:   (heads*d_k,) or None
    Returns (..., heads, d_k) in x.dtype.

    compute_dtype is the MXU operand dtype (accumulation is always f32).
    Pass jnp.float32 (or None) for exact nn.Linear f32 semantics; bf16 is the
    fast, documented-lossy default.
    """
    *head_shape, d_model = x.shape
    n = heads * d_k
    k = d_model
    assert weight.shape == (n, k), weight.shape

    m = 1
    for s in head_shape:
        m *= int(s)

    out_dtype = x.dtype
    if compute_dtype is None:
        compute_dtype = x.dtype
    cbytes = jnp.dtype(compute_dtype).itemsize
    obytes = jnp.dtype(out_dtype).itemsize

    budget = _vmem_budget_bytes()
    tm, tn, tk, k_split = _select_plan(m, n, k, cbytes, obytes, budget)

    # One-time operand prep: transpose + cast fuse into a single XLA op.
    x2d = x.reshape(m, k).astype(compute_dtype)
    wt = weight.T.astype(compute_dtype)                       # (K, N)
    if bias is None:
        b2d = jnp.zeros((1, n), jnp.float32)
    else:
        b2d = bias.astype(jnp.float32).reshape(1, n)

    # Only the reduction dim ever needs zero padding (K-split plan only).
    k_pad = _round_up(k, tk) if k_split else k
    if k_pad != k:
        x2d = jnp.pad(x2d, ((0, 0), (0, k_pad - k)))
        wt = jnp.pad(wt, ((0, k_pad - k), (0, 0)))

    gm = _cdiv(m, tm)
    gn = _cdiv(n, tn)

    if k_split:
        gk = k_pad // tk
        grid = (gm, gn, gk)
        in_specs = [
            pl.BlockSpec((tm, tk), lambda i, j, kk: (i, kk)),
            pl.BlockSpec((tk, tn), lambda i, j, kk: (kk, j)),
            pl.BlockSpec((1, tn), lambda i, j, kk: (0, j)),
        ]
        out_spec = pl.BlockSpec((tm, tn), lambda i, j, kk: (i, j))
        scratch = [pltpu.VMEM((tm, tn), jnp.float32)]
        dims = ("parallel", "parallel", "arbitrary")
        kernel = _linear_ksplit_kernel
        x_reads, w_reads = gn, gm
    else:
        grid = (gm, gn)
        in_specs = [
            pl.BlockSpec((tm, k_pad), lambda i, j: (i, 0)),
            pl.BlockSpec((k_pad, tn), lambda i, j: (0, j)),
            pl.BlockSpec((1, tn), lambda i, j: (0, j)),
        ]
        out_spec = pl.BlockSpec((tm, tn), lambda i, j: (i, j))
        scratch = []
        dims = ("parallel", "parallel")
        kernel = _linear_kernel
        x_reads, w_reads = 1, (1 if gn == 1 else gm)

    cost = pl.CostEstimate(
        flops=int(2 * m * n * k_pad),
        transcendentals=0,
        bytes_accessed=int(m * k_pad * cbytes * x_reads
                           + k_pad * n * cbytes * w_reads
                           + n * 4 + m * n * obytes))

    y2d = pl.pallas_call(
        kernel,
        out_shape=jax.ShapeDtypeStruct((m, n), out_dtype),
        grid_spec=pltpu.PrefetchScalarGridSpec(
            num_scalar_prefetch=0,
            grid=grid,
            in_specs=in_specs,
            out_specs=out_spec,
            scratch_shapes=scratch,
        ),
        compiler_params=pltpu.CompilerParams(
            dimension_semantics=dims,
            vmem_limit_bytes=int(budget)),
        cost_estimate=cost,
    )(x2d, wt, b2d)

    return y2d.reshape(*head_shape, heads, d_k)


# --------------------------------- test ------------------------------------


if __name__ == "__main__":
    # Small shapes consistent with the module's forward: x is (seq, batch, d_model).
    seq, batch, d_model = 8, 2, 32
    heads, d_k = 4, 8
    use_bias = True

    key = jax.random.PRNGKey(0)
    kx, kw, kb = jax.random.split(key, 3)

    x = jax.random.normal(kx, (seq, batch, d_model), dtype=jnp.float32)
    # Mimics nn.Linear's uniform(-1/sqrt(in), 1/sqrt(in)) init, deterministically.
    bound = 1.0 / (d_model ** 0.5)
    weight = jax.random.uniform(kw, (heads * d_k, d_model), jnp.float32, -bound, bound)
    bias = (jax.random.uniform(kb, (heads * d_k,), jnp.float32, -bound, bound)
            if use_bias else None)

    ref = (x.reshape(-1, d_model) @ weight.T
           + (bias if bias is not None else 0.0)).reshape(seq, batch, heads, d_k)

    # Exact nn.Linear semantics (f32 MXU operands): tight tolerance.
    out_f32 = prepare_for_multihead_attention(
        x, weight, bias, heads, d_k, compute_dtype=jnp.float32)
    out_f32 = jax.block_until_ready(out_f32)
    assert out_f32.shape == (seq, batch, heads, d_k), out_f32.shape
    assert jnp.allclose(out_f32, ref, atol=1e-4, rtol=1e-4)

    # Fast default (bf16 MXU operands, f32 accumulation): looser tolerance.
    out_bf16 = prepare_for_multihead_attention(x, weight, bias, heads, d_k)
    out_bf16 = jax.block_until_ready(out_bf16)
    assert out_bf16.shape == (seq, batch, heads, d_k), out_bf16.shape
    assert jnp.allclose(out_bf16, ref, atol=5e-2, rtol=5e-2)

    print("KERNEL_OK")
</pallas_src>

<mosaic_0001>
module attributes {stable_mosaic.version = 11 : i64} {
  func.func @_linear_kernel(%arg0: i32, %arg1: i32, %arg2: memref<16x32xf32, #tpu.memory_space<vmem>>, %arg3: memref<32x32xf32, #tpu.memory_space<vmem>>, %arg4: memref<1x32xf32, #tpu.memory_space<vmem>>, %arg5: memref<16x32xf32, #tpu.memory_space<vmem>>) attributes {dimension_semantics = [#tpu.dimension_semantics<parallel>, #tpu.dimension_semantics<parallel>], iteration_bounds = array<i64: 1, 1>, scalar_prefetch = 0 : i64, scratch_operands = 0 : i64, tpu.core_type = #tpu.core_type<tc>, window_params = [{transform_indices = @transform_0, window_bounds = array<i64: 16, 32>}, {transform_indices = @transform_1, window_bounds = array<i64: 32, 32>}, {transform_indices = @transform_2, window_bounds = array<i64: 1, 32>}, {transform_indices = @transform_3, window_bounds = array<i64: 16, 32>}]} {
    %c0 = arith.constant 0 : index
    %c0_0 = arith.constant 0 : index
    %0 = vector.load %arg2[%c0, %c0_0] : memref<16x32xf32, #tpu.memory_space<vmem>>, vector<16x32xf32>
    %c0_1 = arith.constant 0 : index
    %c0_2 = arith.constant 0 : index
    %1 = vector.load %arg3[%c0_1, %c0_2] : memref<32x32xf32, #tpu.memory_space<vmem>>, vector<32x32xf32>
    %cst = arith.constant dense<0.000000e+00> : vector<16x32xf32>
    %2 = tpu.matmul %0, %1, %cst {dimension_numbers = #tpu.dot_dimension_numbers<[1], [0], [0], [1], [0, 0, 1, 1], [], []>} : vector<16x32xf32>, vector<32x32xf32>, vector<16x32xf32> -> vector<16x32xf32>
    %c0_3 = arith.constant 0 : index
    %c0_4 = arith.constant 0 : index
    %3 = vector.load %arg4[%c0_3, %c0_4] : memref<1x32xf32, #tpu.memory_space<vmem>>, vector<1x32xf32>
    %4 = vector.broadcast %3 : vector<1x32xf32> to vector<16x32xf32>
    %5 = arith.addf %2, %4 : vector<16x32xf32>
    %c0_5 = arith.constant 0 : index
    %c0_6 = arith.constant 0 : index
    %6 = vector.load %arg5[%c0_5, %c0_6] : memref<16x32xf32, #tpu.memory_space<vmem>>, vector<16x32xf32>
    tpu.vector_store %arg5[%c0_5, %c0_6], %5 {strides = array<i32>} : memref<16x32xf32, #tpu.memory_space<vmem>>, vector<16x32xf32>,
    return
  }
  func.func @transform_0(%arg0: i32, %arg1: i32) -> (i32, i32) {
    %c0_i32 = arith.constant 0 : i32
    %c0_i32_0 = arith.constant 0 : i32
    return %arg0, %c0_i32 : i32, i32
  }
  func.func @transform_1(%arg0: i32, %arg1: i32) -> (i32, i32) {
    %c0_i32 = arith.constant 0 : i32
    %c0_i32_0 = arith.constant 0 : i32
    return %c0_i32, %arg1 : i32, i32
  }
  func.func @transform_2(%arg0: i32, %arg1: i32) -> (i32, i32) {
    %c0_i32 = arith.constant 0 : i32
    %c0_i32_0 = arith.constant 0 : i32
    return %c0_i32, %arg1 : i32, i32
  }
  func.func @transform_3(%arg0: i32, %arg1: i32) -> (i32, i32) {
    %c0_i32 = arith.constant 0 : i32
    return %arg0, %arg1 : i32, i32
  }
}

</mosaic_0001>

<llo_original>
// kernel: tpu_custom_call.1
$region0: #{tpu_custom_call.1}
  #allocation0 [shape = 'u32[]', space=smem, size = 0x4, offset = 0x4, fixed_abs, tag = 'smem constant byte address 0x4 - core index']
  #allocation1 [shape = 'u32[72,128]{1,0:T(1,128)}', space=vmem, size = 0x9000, scoped, tag = 'internal scratch']
  %s0 = inlined_call_operand.hbm [shape: f32[16,32], index: 0, kind: input, shape index: {}]
  %s1 = inlined_call_operand.hbm [shape: f32[32,32], index: 1, kind: input, shape index: {}]
  %s2 = inlined_call_operand.vmem [shape: f32[1,32], index: 2, kind: input, shape index: {}]
  %s3 = inlined_call_operand.hbm [shape: f32[16,32], index: 3, kind: output, shape index: {}]
  %s4 = sld [smem:[#allocation0]]
  $region30: #{tpu_custom_call.1} parent=0
    _
  %s6 = ssub.s32 1, %s4
  %s7 = scalar_select 0, %s6, %s4
  $region1: #{tpu_custom_call.1} parent=0
    #allocation2 [shape = 'u8[8192]{0}', space=vmem, size = 0x2000, scoped, tag = 'input window, operand 0, single buffered']
    #allocation3 [shape = 's32[1]{0}', space=sflag, size = 0x4, scoped, tag = 'scoped memory for tpu_custom_call.1']
    #allocation4 [shape = 's32[1]{0}', space=sflag, size = 0x4, scoped, tag = 'scoped memory for tpu_custom_call.1']
    #allocation5 [shape = 'u8[16384]{0}', space=vmem, size = 0x4000, scoped, tag = 'input window, operand 1, single buffered']
    #allocation6 [shape = 's32[1]{0}', space=sflag, size = 0x4, scoped, tag = 'scoped memory for tpu_custom_call.1']
    #allocation7 [shape = 'u8[8192]{0}', space=vmem, size = 0x2000, scoped, tag = 'output window, operand 0, single buffered']
    %8 = vsyncpa [#allocation3], 0
    %9 = vsyncpa [#allocation6], 0
    %10 = vsyncpa [#allocation4], 0
    // Predicated region
    $region2: #{tpu_custom_call.1} parent=1 // pred_check
      _
    $region3: #{tpu_custom_call.1} parent=1 // pred_check_branch
      %12 = sbr.rel (0) target = $region5
    $region4: #{tpu_custom_call.1} parent=1 // pred_region
      %14 = vsyncadd [#allocation3], 0
      %s15 = sshll.u32 %s0, 4
      %s16 = int_to_ptr.hbm [resolvable:$true] %s15
      %s17 = sshll.u32 [#allocation2], 4
      %s18 = int_to_ptr.vmem [resolvable:$true] %s17
      %23 = dma.hbm_to_vmem [thread:$0]  %s16, 256, %s18, [#allocation3], 128, 128, 8
    $region5: #{tpu_custom_call.1} parent=1 // pred_fallthru
      _
    // Predicated region
    $region6: #{tpu_custom_call.1} parent=1 // pred_check
      _
    $region7: #{tpu_custom_call.1} parent=1 // pred_check_branch
      %25 = sbr.rel (0) target = $region9
    $region8: #{tpu_custom_call.1} parent=1 // pred_region
      %27 = vsyncadd [#allocation6], 0
      %s28 = sshll.u32 %s1, 4
      %s29 = int_to_ptr.hbm [resolvable:$true] %s28
      %s30 = sshll.u32 [#allocation5], 4
      %s31 = int_to_ptr.vmem [resolvable:$true] %s30
      %36 = dma.hbm_to_vmem [thread:$0]  %s29, 512, %s31, [#allocation6], 128, 128, 8
    $region9: #{tpu_custom_call.1} parent=1 // pred_fallthru
      _
    // Predicated region
    $region10: #{tpu_custom_call.1} parent=1 // pred_check
      _
    $region11: #{tpu_custom_call.1} parent=1 // pred_check_branch
      %38 = sbr.rel (0) target = $region13
    $region12: #{tpu_custom_call.1} parent=1 // pred_region
      _
    $region13: #{tpu_custom_call.1} parent=1 // pred_fallthru
      _
    // Predicated region
    $region14: #{tpu_custom_call.1} parent=1 // pred_check
      _
    $region15: #{tpu_custom_call.1} parent=1 // pred_check_branch
      %40 = sbr.rel (0) target = $region17
    $region16: #{tpu_custom_call.1} parent=1 // pred_region
      %42 = dma.done [#allocation3], 256
    $region17: #{tpu_custom_call.1} parent=1 // pred_fallthru
      _
    // Predicated region
    $region18: #{tpu_custom_call.1} parent=1 // pred_check
      _
    $region19: #{tpu_custom_call.1} parent=1 // pred_check_branch
      %44 = sbr.rel (0) target = $region21
    $region20: #{tpu_custom_call.1} parent=1 // pred_region
      %46 = dma.done [#allocation6], 512
    $region21: #{tpu_custom_call.1} parent=1 // pred_fallthru
      _
    %v47 = vld [vmem:[#allocation2] sm:$0xff]
    %v48 = vld [vmem:[#allocation2 + $0x8] sm:$0xff]
    %v49 = vld [vmem:[#allocation5] sm:$0xff]
    %v50 = vld [vmem:[#allocation5 + $0x8] sm:$0xff]
    %v51 = vld [vmem:[#allocation5 + $0x10] sm:$0xff]
    %v52 = vld [vmem:[#allocation5 + $0x18] sm:$0xff]
    %v53 = vld [vmem:[%s2] sm:$0x1]
    %v55 = vperm.slane %v53, 0
    %vm57 = vcmask 261120
    %v59 = vsel %vm57, %v47, 0
    %v62 = vsel %vm57, %v48, 0
    %64 = vmatpush.msra.mxu0 0.0
    %65 = vmatpush.msra.mxu0 0.0
    %66 = vmatpush.msra.mxu0 0.0
    %67 = vmatpush.msra.mxu0 0.0
    %68 = vmatpush.msra.mxu0 0.0
    %69 = vmatpush.msra.mxu0 0.0
    %70 = vmatpush.msra.mxu0 0.0
    %71 = vmatpush.msra.mxu0 0.0
    %72 = vmatpush.msra.mxu0 0.0
    %73 = vmatpush.msra.mxu0 0.0
    %74 = vmatpush.msra.mxu0 0.0
    %75 = vmatpush.msra.mxu0 0.0
    %76 = vmatpush.msra.mxu0 %v52
    %77 = vmatpush.msra.mxu0 %v51
    %78 = vmatpush.msra.mxu0 %v50
    %79 = vmatpush.msra.mxu0 %v49
    %80 = vmatmul.f32.gmra.mxu0 %v59
    %v81 = vpop.f32.mrf.mxu0
    %v82 = vadd.f32 %v55, %v81
    %83 = vmatmul.f32.gmra.mxu0 %v62
    %v84 = vpop.f32.mrf.mxu0
    %v85 = vadd.f32 %v55, %v84
    %86 = vdwg.mxu0
    %87 = vst.msk [vmem:[#allocation7] sm:$0xff] %vm57, %v82
    %88 = vst.msk [vmem:[#allocation7 + $0x8] sm:$0xff] %vm57, %v85
    // Predicated region
    $region22: #{tpu_custom_call.1} parent=1 // pred_check
      _
    $region23: #{tpu_custom_call.1} parent=1 // pred_check_branch
      %90 = sbr.rel (0) target = $region25
    $region24: #{tpu_custom_call.1} parent=1 // pred_region
      %92 = vsyncadd [#allocation4], 0
      %s93 = sshll.u32 [#allocation7], 4
      %s94 = int_to_ptr.vmem [resolvable:$true] %s93
      %s95 = sshll.u32 %s3, 4
      %s96 = int_to_ptr.hbm [resolvable:$true] %s95
      %101 = dma.vmem_to_hbm [thread:$0]  %s94, 256, %s96, [#allocation4], 128, 128, 8
    $region25: #{tpu_custom_call.1} parent=1 // pred_fallthru
      _
    // Predicated region
    $region26: #{tpu_custom_call.1} parent=1 // pred_check
      _
    $region27: #{tpu_custom_call.1} parent=1 // pred_check_branch
      %103 = sbr.rel (0) target = $region29
    $region28: #{tpu_custom_call.1} parent=1 // pred_region
      %105 = dma.done [#allocation4], 256
    $region29: #{tpu_custom_call.1} parent=1 // pred_fallthru
      _
    %106 = vsyncpa [#allocation3], 1
    %107 = vsyncpa [#allocation6], 1
    %108 = vsyncpa [#allocation4], 1

</llo_original>
